<compile_context>
chip_gen: v6e
topology: v6e:2x2x1
jax: 0.10.0
libtpu: 0.0.40
codegen_flags: <defaults>
</compile_context>

<pallas_src>
from functools import partial

import jax
import jax.numpy as jnp
from jax import lax
from jax.experimental import pallas as pl
from jax.experimental.pallas import tpu as pltpu

EMBED_DIM = 32        # output embedding dim
NUM_POS = 6           # vocab size for col/row embeddings
PORT_DIM = 6          # input features of port_embed linear

GROUP = 4             # original rows packed per kernel row -> 4*32 = 128 output lanes
SUB_W = 2 + 1 + PORT_DIM                    # 9 packed f32 lanes per original row
FEAT_SEG = 32                               # feats lanes per group (32-lane aligned)
ACTIVE = 2 * NUM_POS + 1 + PORT_DIM + 1     # 20 active feature rows per group
FUSED_K = GROUP * FEAT_SEG                  # 128
FUSED_N = GROUP * EMBED_DIM                 # 128 (lane-dense output)


def box_embed_kernel(x_ref, w_ref, out_ref):
    """x_ref: (tg, 36) packed rows (GROUP original rows per kernel row),
       w_ref: (128, 128) block-diagonal fused weight, out_ref: (tg, 128)."""
    x = x_ref[...]                                               # (tg, GROUP*SUB_W) f32
    tg = x.shape[0]
    iota6 = lax.broadcasted_iota(jnp.int32, (tg, NUM_POS), 1).astype(jnp.float32)
    ones = jnp.ones((tg, 1), jnp.float32)                       # bias feature (in-kernel)
    zpad = jnp.zeros((tg, FEAT_SEG - ACTIVE), jnp.float32)

    segs = []
    for j in range(GROUP):                                       # static unroll
        blk = x[:, j * SUB_W:(j + 1) * SUB_W]                    # (tg, 9): col,row,weight,port
        col_oh = (blk[:, 0:1] == iota6).astype(jnp.float32)      # (tg, 6)
        row_oh = (blk[:, 1:2] == iota6).astype(jnp.float32)      # (tg, 6)
        # [col_oh(6), row_oh(6), weight(1), port(6), one(1), zeros(12)] -> 32 lanes
        segs.append(jnp.concatenate([col_oh, row_oh, blk[:, 2:SUB_W], ones, zpad], axis=1))

    feats = jnp.concatenate(segs, axis=1)                        # (tg, 128), 32-aligned segs
    # One fused MXU matmul: both embedding lookups, both Linear layers, both biases.
    out_ref[...] = jnp.dot(feats, w_ref[...],
                           preferred_element_type=jnp.float32).astype(out_ref.dtype)


def fuse_params(col_tab, row_tab, ww, bw, wp, bp):
    """Build the (128, 128) block-diagonal fused weight from PyTorch-shaped params.
       col_tab/row_tab: (6,32); ww: (32,1); bw: (32,); wp: (32,6); bp: (32,)."""
    w_small = jnp.concatenate(
        [col_tab, row_tab, ww.T, wp.T, (bw + bp)[None, :]], axis=0
    ).astype(jnp.float32)                                        # (20, 32)
    w_seg = jnp.pad(w_small, ((0, FEAT_SEG - ACTIVE), (0, 0)))   # (32, 32)
    wfused = jnp.zeros((FUSED_K, FUSED_N), jnp.float32)
    for j in range(GROUP):
        wfused = wfused.at[j * FEAT_SEG:(j + 1) * FEAT_SEG,
                           j * EMBED_DIM:(j + 1) * EMBED_DIM].set(w_seg)
    return wfused


def _round_up(x, m):
    return pl.cdiv(x, m) * m


def _pick_tile(rows_g, tm):
    """Kernel rows per grid step: as large as tm allows, but >=2 grid steps when there is
       enough work (v7x: 2 TensorCores) and always a multiple of 8 sublanes."""
    tg = max(8, _round_up(tm // GROUP, 8))
    if rows_g > 8:
        tg = min(tg, _round_up(pl.cdiv(rows_g, 2), 8))           # ensure >=2 steps
    return min(tg, _round_up(rows_g, 8))


@partial(jax.jit, static_argnames=("tm", "out_dtype"))
def box_embedding(col, row, weight, port, wfused, *, tm=16384, out_dtype=jnp.float32):
    """col/row: (B,N) int, weight: (B,N,1) f32, port: (B,N,6) f32,
       wfused: (128,128) from fuse_params.  Returns (B,N,32) in out_dtype."""
    B, N = col.shape
    M = B * N

    # One dense f32 (M, 9) slab: [col, row, weight, port(6)].  Under jit the packing
    # (casts + concat + tiny pad + reshape) is a single XLA fusion feeding the kernel.
    packed = jnp.concatenate(
        [col.reshape(M, 1).astype(jnp.float32),
         row.reshape(M, 1).astype(jnp.float32),
         weight.reshape(M, 1).astype(jnp.float32),
         port.reshape(M, PORT_DIM).astype(jnp.float32)], axis=1)          # (M, 9)

    M4 = _round_up(M, GROUP)                  # pad at most 3 rows (no full-slab pad copy)
    if M4 != M:
        packed = jnp.pad(packed, ((0, M4 - M), (0, 0)))
    rows_g = M4 // GROUP
    packed4 = packed.reshape(rows_g, GROUP * SUB_W)              # (rows_g, 36), free reshape

    tg = _pick_tile(rows_g, tm)
    grid = (pl.cdiv(rows_g, tg),)             # ragged last block: OOB output writes masked

    out = pl.pallas_call(
        box_embed_kernel,
        out_shape=jax.ShapeDtypeStruct((rows_g, FUSED_N), out_dtype),
        grid=grid,
        in_specs=[
            pl.BlockSpec((tg, GROUP * SUB_W), lambda i: (i, 0)),   # packed rows
            pl.BlockSpec((FUSED_K, FUSED_N), lambda i: (0, 0)),    # fused weight (resident)
        ],
        out_specs=pl.BlockSpec((tg, FUSED_N), lambda i: (i, 0)),
        compiler_params=pltpu.CompilerParams(
            dimension_semantics=("parallel",),
            vmem_limit_bytes=32 * 1024 * 1024,
        ),
    )(packed4, wfused)

    # (rows_g, 128) -> (M4, 32) is a bitwise-free row-major reinterpretation.
    return out.reshape(M4, EMBED_DIM)[:M].reshape(B, N, EMBED_DIM)


def init_params(key):
    """Raw PyTorch-shaped parameters."""
    k = jax.random.split(key, 6)
    col_tab = jax.random.normal(k[0], (NUM_POS, EMBED_DIM), jnp.float32)    # Embedding(6,32)
    row_tab = jax.random.normal(k[1], (NUM_POS, EMBED_DIM), jnp.float32)    # Embedding(6,32)
    ww = jax.random.normal(k[2], (EMBED_DIM, 1), jnp.float32) * 0.5         # Linear(1,32).weight
    bw = jax.random.normal(k[3], (EMBED_DIM,), jnp.float32) * 0.1           # Linear(1,32).bias
    wp = jax.random.normal(k[4], (EMBED_DIM, PORT_DIM), jnp.float32) * 0.5  # Linear(6,32).weight
    bp = jax.random.normal(k[5], (EMBED_DIM,), jnp.float32) * 0.1           # Linear(6,32).bias
    return col_tab, row_tab, ww, bw, wp, bp


def reference(col, row, weight, port, raw_params):
    col_tab, row_tab, ww, bw, wp, bp = raw_params
    col_e = col_tab[col]
    row_e = row_tab[row]
    w_e = weight.astype(jnp.float32) @ ww.T + bw
    p_e = port.astype(jnp.float32) @ wp.T + bp
    return col_e + row_e + w_e + p_e


if __name__ == "__main__":
    key = jax.random.PRNGKey(0)
    kp, kc, kr, kw, kport = jax.random.split(key, 5)

    raw = init_params(kp)
    wfused = fuse_params(*raw)

    # Small demo consistent with the module: 2 samples, 8 boxes each (default big tile,
    # single ragged block).
    B, N = 2, 8
    col = jax.random.randint(kc, (B, N), 0, NUM_POS, dtype=jnp.int32)
    row = jax.random.randint(kr, (B, N), 0, NUM_POS, dtype=jnp.int32)
    weight = jax.random.normal(kw, (B, N, 1), jnp.float32)
    port = jax.random.normal(kport, (B, N, PORT_DIM), jnp.float32)

    out = jax.block_until_ready(box_embedding(col, row, weight, port, wfused))
    ref = reference(col, row, weight, port, raw)
    assert out.shape == (B, N, EMBED_DIM)
    assert jnp.allclose(out, ref, atol=1e-5, rtol=1e-5), "mismatch vs pure-JAX reference"

    # Second check: M=150 (not a multiple of GROUP) and tm=32 -> tg=8, grid of 5 with a
    # ragged last block; exercises the row-pad + masked-OOB-write paths.
    B2, N2 = 3, 50
    col2 = jax.random.randint(kc, (B2, N2), 0, NUM_POS, dtype=jnp.int32)
    row2 = jax.random.randint(kr, (B2, N2), 0, NUM_POS, dtype=jnp.int32)
    weight2 = jax.random.normal(kw, (B2, N2, 1), jnp.float32)
    port2 = jax.random.normal(kport, (B2, N2, PORT_DIM), jnp.float32)

    out2 = jax.block_until_ready(
        box_embedding(col2, row2, weight2, port2, wfused, tm=32))
    ref2 = reference(col2, row2, weight2, port2, raw)
    assert out2.shape == (B2, N2, EMBED_DIM)
    assert jnp.allclose(out2, ref2, atol=1e-5, rtol=1e-5), "mismatch (ragged/multi-tile path)"

    print("KERNEL_OK")
</pallas_src>

<mosaic_0001>
module attributes {stable_mosaic.version = 11 : i64} {
  func.func @box_embed_kernel(%arg0: i32, %arg1: memref<8x36xf32, #tpu.memory_space<vmem>>, %arg2: memref<128x128xf32, #tpu.memory_space<vmem>>, %arg3: memref<8x128xf32, #tpu.memory_space<vmem>>) attributes {dimension_semantics = [#tpu.dimension_semantics<parallel>], iteration_bounds = array<i64: 1>, scalar_prefetch = 0 : i64, scratch_operands = 0 : i64, tpu.core_type = #tpu.core_type<tc>, window_params = [{transform_indices = @transform_0, window_bounds = array<i64: 8, 36>}, {pipeline_mode = #tpu.pipeline_mode<synchronous>, transform_indices = @transform_1, window_bounds = array<i64: 128, 128>}, {transform_indices = @transform_2, window_bounds = array<i64: 8, 128>}]} {
    %c0 = arith.constant 0 : index
    %c0_0 = arith.constant 0 : index
    %0 = vector.load %arg1[%c0, %c0_0] : memref<8x36xf32, #tpu.memory_space<vmem>>, vector<8x36xf32>
    %1 = tpu.iota {dimensions = array<i32: 1>} : vector<8x6xi32>
    %2 = arith.sitofp %1 : vector<8x6xi32> to vector<8x6xf32>
    %cst = arith.constant 1.000000e+00 : f32
    %3 = vector.broadcast %cst : f32 to vector<8x1xf32>
    %cst_1 = arith.constant 0.000000e+00 : f32
    %4 = vector.broadcast %cst_1 : f32 to vector<8x12xf32>
    %5 = vector.extract_strided_slice %0 {offsets = [0, 0], sizes = [8, 9], strides = [1, 1]} : vector<8x36xf32> to vector<8x9xf32>
    %6 = vector.extract_strided_slice %5 {offsets = [0, 0], sizes = [8, 1], strides = [1, 1]} : vector<8x9xf32> to vector<8x1xf32>
    %7 = vector.broadcast %6 : vector<8x1xf32> to vector<8x6xf32>
    %8 = arith.cmpf oeq, %7, %2 : vector<8x6xf32>
    %9 = arith.extui %8 : vector<8x6xi1> to vector<8x6xi32>
    %10 = arith.sitofp %9 : vector<8x6xi32> to vector<8x6xf32>
    %11 = vector.extract_strided_slice %5 {offsets = [0, 1], sizes = [8, 1], strides = [1, 1]} : vector<8x9xf32> to vector<8x1xf32>
    %12 = vector.broadcast %11 : vector<8x1xf32> to vector<8x6xf32>
    %13 = arith.cmpf oeq, %12, %2 : vector<8x6xf32>
    %14 = arith.extui %13 : vector<8x6xi1> to vector<8x6xi32>
    %15 = arith.sitofp %14 : vector<8x6xi32> to vector<8x6xf32>
    %16 = vector.extract_strided_slice %5 {offsets = [0, 2], sizes = [8, 7], strides = [1, 1]} : vector<8x9xf32> to vector<8x7xf32>
    %17 = tpu.concatenate %10, %15, %16, %3, %4 in 1 : vector<8x6xf32>, vector<8x6xf32>, vector<8x7xf32>, vector<8x1xf32>, vector<8x12xf32> -> vector<8x32xf32>
    %18 = vector.extract_strided_slice %0 {offsets = [0, 9], sizes = [8, 9], strides = [1, 1]} : vector<8x36xf32> to vector<8x9xf32>
    %19 = vector.extract_strided_slice %18 {offsets = [0, 0], sizes = [8, 1], strides = [1, 1]} : vector<8x9xf32> to vector<8x1xf32>
    %20 = vector.broadcast %19 : vector<8x1xf32> to vector<8x6xf32>
    %21 = arith.cmpf oeq, %20, %2 : vector<8x6xf32>
    %22 = arith.extui %21 : vector<8x6xi1> to vector<8x6xi32>
    %23 = arith.sitofp %22 : vector<8x6xi32> to vector<8x6xf32>
    %24 = vector.extract_strided_slice %18 {offsets = [0, 1], sizes = [8, 1], strides = [1, 1]} : vector<8x9xf32> to vector<8x1xf32>
    %25 = vector.broadcast %24 : vector<8x1xf32> to vector<8x6xf32>
    %26 = arith.cmpf oeq, %25, %2 : vector<8x6xf32>
    %27 = arith.extui %26 : vector<8x6xi1> to vector<8x6xi32>
    %28 = arith.sitofp %27 : vector<8x6xi32> to vector<8x6xf32>
    %29 = vector.extract_strided_slice %18 {offsets = [0, 2], sizes = [8, 7], strides = [1, 1]} : vector<8x9xf32> to vector<8x7xf32>
    %30 = tpu.concatenate %23, %28, %29, %3, %4 in 1 : vector<8x6xf32>, vector<8x6xf32>, vector<8x7xf32>, vector<8x1xf32>, vector<8x12xf32> -> vector<8x32xf32>
    %31 = vector.extract_strided_slice %0 {offsets = [0, 18], sizes = [8, 9], strides = [1, 1]} : vector<8x36xf32> to vector<8x9xf32>
    %32 = vector.extract_strided_slice %31 {offsets = [0, 0], sizes = [8, 1], strides = [1, 1]} : vector<8x9xf32> to vector<8x1xf32>
    %33 = vector.broadcast %32 : vector<8x1xf32> to vector<8x6xf32>
    %34 = arith.cmpf oeq, %33, %2 : vector<8x6xf32>
    %35 = arith.extui %34 : vector<8x6xi1> to vector<8x6xi32>
    %36 = arith.sitofp %35 : vector<8x6xi32> to vector<8x6xf32>
    %37 = vector.extract_strided_slice %31 {offsets = [0, 1], sizes = [8, 1], strides = [1, 1]} : vector<8x9xf32> to vector<8x1xf32>
    %38 = vector.broadcast %37 : vector<8x1xf32> to vector<8x6xf32>
    %39 = arith.cmpf oeq, %38, %2 : vector<8x6xf32>
    %40 = arith.extui %39 : vector<8x6xi1> to vector<8x6xi32>
    %41 = arith.sitofp %40 : vector<8x6xi32> to vector<8x6xf32>
    %42 = vector.extract_strided_slice %31 {offsets = [0, 2], sizes = [8, 7], strides = [1, 1]} : vector<8x9xf32> to vector<8x7xf32>
    %43 = tpu.concatenate %36, %41, %42, %3, %4 in 1 : vector<8x6xf32>, vector<8x6xf32>, vector<8x7xf32>, vector<8x1xf32>, vector<8x12xf32> -> vector<8x32xf32>
    %44 = vector.extract_strided_slice %0 {offsets = [0, 27], sizes = [8, 9], strides = [1, 1]} : vector<8x36xf32> to vector<8x9xf32>
    %45 = vector.extract_strided_slice %44 {offsets = [0, 0], sizes = [8, 1], strides = [1, 1]} : vector<8x9xf32> to vector<8x1xf32>
    %46 = vector.broadcast %45 : vector<8x1xf32> to vector<8x6xf32>
    %47 = arith.cmpf oeq, %46, %2 : vector<8x6xf32>
    %48 = arith.extui %47 : vector<8x6xi1> to vector<8x6xi32>
    %49 = arith.sitofp %48 : vector<8x6xi32> to vector<8x6xf32>
    %50 = vector.extract_strided_slice %44 {offsets = [0, 1], sizes = [8, 1], strides = [1, 1]} : vector<8x9xf32> to vector<8x1xf32>
    %51 = vector.broadcast %50 : vector<8x1xf32> to vector<8x6xf32>
    %52 = arith.cmpf oeq, %51, %2 : vector<8x6xf32>
    %53 = arith.extui %52 : vector<8x6xi1> to vector<8x6xi32>
    %54 = arith.sitofp %53 : vector<8x6xi32> to vector<8x6xf32>
    %55 = vector.extract_strided_slice %44 {offsets = [0, 2], sizes = [8, 7], strides = [1, 1]} : vector<8x9xf32> to vector<8x7xf32>
    %56 = tpu.concatenate %49, %54, %55, %3, %4 in 1 : vector<8x6xf32>, vector<8x6xf32>, vector<8x7xf32>, vector<8x1xf32>, vector<8x12xf32> -> vector<8x32xf32>
    %57 = tpu.concatenate %17, %30, %43, %56 in 1 : vector<8x32xf32>, vector<8x32xf32>, vector<8x32xf32>, vector<8x32xf32> -> vector<8x128xf32>
    %c0_2 = arith.constant 0 : index
    %c0_3 = arith.constant 0 : index
    %58 = vector.load %arg2[%c0_2, %c0_3] : memref<128x128xf32, #tpu.memory_space<vmem>>, vector<128x128xf32>
    %cst_4 = arith.constant dense<0.000000e+00> : vector<8x128xf32>
    %59 = tpu.matmul %57, %58, %cst_4 {dimension_numbers = #tpu.dot_dimension_numbers<[1], [0], [0], [1], [0, 0, 1, 1], [], []>} : vector<8x128xf32>, vector<128x128xf32>, vector<8x128xf32> -> vector<8x128xf32>
    %c0_5 = arith.constant 0 : index
    %c0_6 = arith.constant 0 : index
    %60 = vector.load %arg3[%c0_5, %c0_6] : memref<8x128xf32, #tpu.memory_space<vmem>>, vector<8x128xf32>
    tpu.vector_store %arg3[%c0_5, %c0_6], %59 {strides = array<i32>} : memref<8x128xf32, #tpu.memory_space<vmem>>, vector<8x128xf32>,
    return
  }
  func.func @transform_0(%arg0: i32) -> (i32, i32) {
    %c0_i32 = arith.constant 0 : i32
    %c0_i32_0 = arith.constant 0 : i32
    return %arg0, %c0_i32 : i32, i32
  }
  func.func @transform_1(%arg0: i32) -> (i32, i32) {
    %c0_i32 = arith.constant 0 : i32
    %c0_i32_0 = arith.constant 0 : i32
    %c0_i32_1 = arith.constant 0 : i32
    return %c0_i32, %c0_i32_0 : i32, i32
  }
  func.func @transform_2(%arg0: i32) -> (i32, i32) {
    %c0_i32 = arith.constant 0 : i32
    %c0_i32_0 = arith.constant 0 : i32
    return %arg0, %c0_i32 : i32, i32
  }
}

</mosaic_0001>

<llo_original>
// kernel: box_embedding.1
$region0: #{box_embedding.1}
  #allocation0 [shape = 'u32[]', space=smem, size = 0x4, offset = 0x4, fixed_abs, tag = 'smem constant byte address 0x4 - core index']
  #allocation1 [shape = 'u32[144,128]{1,0:T(1,128)}', space=vmem, size = 0x12000, scoped, tag = 'internal scratch']
  %s0 = inlined_call_operand.vmem [shape: f32[4,36], index: 0, kind: input, shape index: {}]
  %s1 = inlined_call_operand.vmem [shape: f32[128,128], index: 1, kind: input, shape index: {}]
  %s2 = inlined_call_operand.vmem [shape: f32[4,128], index: 2, kind: output, shape index: {}]
  %s3 = sld [smem:[#allocation0]]
  $region48: #{box_embedding.1} parent=0
    _
  %s5 = ssub.s32 1, %s3
  %s6 = scalar_select 0, %s5, %s3
  $region1: #{box_embedding.1} parent=0
    #allocation2 [shape = 'u8[4096]{0}', space=vmem, size = 0x1000, scoped, tag = 'output window, operand 0, single buffered']
    // Predicated region
    $region2: #{box_embedding.1} parent=1 // pred_check
      _
    $region3: #{box_embedding.1} parent=1 // pred_check_branch
      %8 = sbr.rel (0) target = $region5
    $region4: #{box_embedding.1} parent=1 // pred_region
      _
    $region5: #{box_embedding.1} parent=1 // pred_fallthru
      _
    // Predicated region
    $region6: #{box_embedding.1} parent=1 // pred_check
      _
    $region7: #{box_embedding.1} parent=1 // pred_check_branch
      %10 = sbr.rel (0) target = $region9
    $region8: #{box_embedding.1} parent=1 // pred_region
      _
    $region9: #{box_embedding.1} parent=1 // pred_fallthru
      _
    %v11 = vld [vmem:[%s0] sm:$0xff]
    %v12 = vlaneseq
    %v13 = vand.u32 %v12, 127
    %v14 = vcvt.s32.f32 %v13
    %16 = vset.pattern.permute.xlu0 0
    %17 = vperm.xlu0 %16, %v11
    %v18 = vpop.permute.xlu0 %17
    %vm20 = vcmp.eq.f32.partialorder %v18, %v14
    %v21 = vsel %vm20, 1, 0
    %v22 = vcvt.s32.f32 %v21
    %23 = vset.pattern.permute.xlu0 1
    %24 = vperm.xlu0 %23, %v11
    %v25 = vpop.permute.xlu0 %24
    %vm27 = vcmp.eq.f32.partialorder %v25, %v14
    %v28 = vsel %vm27, 1, 0
    %v29 = vcvt.s32.f32 %v28
    %31 = vrot.lane.b32.xlu0 %v29, 6
    %v32 = vpop.permute.xlu0 %31
    %34 = vrot.lane.b32.xlu0 %v11, 10
    %v35 = vpop.permute.xlu0 %34
    %vm37 = vcmask 48128
    %v38 = vsel %vm37, %v22, %v32
    %vm39 = vcmask 97280
    %v40 = vsel %vm39, %v38, %v35
    %vm41 = vcmask 154624
    %v42 = vsel %vm41, %v40, 1.0
    %vm43 = vcmask 162816
    %v44 = vsel %vm43, %v42, 0.0
    %45 = vset.pattern.permute.xlu0 9
    %46 = vperm.xlu0 %45, %v11
    %v47 = vpop.permute.xlu0 %46
    %vm49 = vcmp.eq.f32.partialorder %v47, %v14
    %v50 = vsel %vm49, 1, 0
    %v51 = vcvt.s32.f32 %v50
    %52 = vset.pattern.permute.xlu0 10
    %53 = vperm.xlu0 %52, %v11
    %v54 = vpop.permute.xlu0 %53
    %vm56 = vcmp.eq.f32.partialorder %v54, %v14
    %v57 = vsel %vm56, 1, 0
    %v58 = vcvt.s32.f32 %v57
    %60 = vrot.lane.b32.xlu0 %v58, 6
    %v61 = vpop.permute.xlu0 %60
    %63 = vrot.lane.b32.xlu0 %v11, 1
    %v64 = vpop.permute.xlu0 %63
    %v66 = vsel %vm37, %v51, %v61
    %v67 = vsel %vm39, %v66, %v64
    %v68 = vsel %vm41, %v67, 1.0
    %v69 = vsel %vm43, %v68, 0.0
    %70 = vset.pattern.permute.xlu0 18
    %71 = vperm.xlu0 %70, %v11
    %v72 = vpop.permute.xlu0 %71
    %vm74 = vcmp.eq.f32.partialorder %v72, %v14
    %v75 = vsel %vm74, 1, 0
    %v76 = vcvt.s32.f32 %v75
    %77 = vset.pattern.permute.xlu0 19
    %78 = vperm.xlu0 %77, %v11
    %v79 = vpop.permute.xlu0 %78
    %vm81 = vcmp.eq.f32.partialorder %v79, %v14
    %v82 = vsel %vm81, 1, 0
    %v83 = vcvt.s32.f32 %v82
    %85 = vrot.lane.b32.xlu0 %v83, 6
    %v86 = vpop.permute.xlu0 %85
    %88 = vrot.lane.b32.xlu0 %v11, 120
    %v89 = vpop.permute.xlu0 %88
    %v91 = vsel %vm37, %v76, %v86
    %v92 = vsel %vm39, %v91, %v89
    %v93 = vsel %vm41, %v92, 1.0
    %v94 = vsel %vm43, %v93, 0.0
    %95 = vset.pattern.permute.xlu0 27
    %96 = vperm.xlu0 %95, %v11
    %v97 = vpop.permute.xlu0 %96
    %vm99 = vcmp.eq.f32.partialorder %v97, %v14
    %v100 = vsel %vm99, 1, 0
    %v101 = vcvt.s32.f32 %v100
    %102 = vset.pattern.permute.xlu0 28
    %103 = vperm.xlu0 %102, %v11
    %v104 = vpop.permute.xlu0 %103
    %vm106 = vcmp.eq.f32.partialorder %v104, %v14
    %v107 = vsel %vm106, 1, 0
    %v108 = vcvt.s32.f32 %v107
    %110 = vrot.lane.b32.xlu0 %v108, 6
    %v111 = vpop.permute.xlu0 %110
    %113 = vrot.lane.b32.xlu0 %v11, 111
    %v114 = vpop.permute.xlu0 %113
    %v116 = vsel %vm37, %v101, %v111
    %v117 = vsel %vm39, %v116, %v114
    %v118 = vsel %vm41, %v117, 1.0
    %v119 = vsel %vm43, %v118, 0.0
    %121 = vrot.lane.b32.xlu0 %v69, 32
    %v122 = vpop.permute.xlu0 %121
    %125 = vrot.lane.b32.xlu0 %v94, 64
    %v126 = vpop.permute.xlu0 %125
    %129 = vrot.lane.b32.xlu0 %v119, 96
    %v130 = vpop.permute.xlu0 %129
    %vm132 = vcmask 261120
    %v133 = vsel %vm132, %v44, %v122
    %vm134 = vcmask 523264
    %v135 = vsel %vm134, %v133, %v126
    %vm136 = vcmask 785408
    %v137 = vsel %vm136, %v135, %v130
    %v138 = vld [vmem:[%s1] sm:$0xff]
    %v139 = vld [vmem:[%s1 + $0x8] sm:$0xff]
    %v140 = vld [vmem:[%s1 + $0x10] sm:$0xff]
    %v141 = vld [vmem:[%s1 + $0x18] sm:$0xff]
    %v142 = vld [vmem:[%s1 + $0x20] sm:$0xff]
    %v143 = vld [vmem:[%s1 + $0x28] sm:$0xff]
    %v144 = vld [vmem:[%s1 + $0x30] sm:$0xff]
    %v145 = vld [vmem:[%s1 + $0x38] sm:$0xff]
    %v146 = vld [vmem:[%s1 + $0x40] sm:$0xff]
    %v147 = vld [vmem:[%s1 + $0x48] sm:$0xff]
    %v148 = vld [vmem:[%s1 + $0x50] sm:$0xff]
    %v149 = vld [vmem:[%s1 + $0x58] sm:$0xff]
    %v150 = vld [vmem:[%s1 + $0x60] sm:$0xff]
    %v151 = vld [vmem:[%s1 + $0x68] sm:$0xff]
    %v152 = vld [vmem:[%s1 + $0x70] sm:$0xff]
    %v153 = vld [vmem:[%s1 + $0x78] sm:$0xff]
    %154 = vmatprep.subr.mxu0 0.0
    %155 = vmatpush1.msra.mxu0 %v153
    %156 = vmatprep.subr.mxu0 0.0
    %157 = vmatpush1.msra.mxu0 %v152
    %158 = vmatprep.subr.mxu0 0.0
    %159 = vmatpush1.msra.mxu0 %v151
    %160 = vmatprep.subr.mxu0 0.0
    %161 = vmatpush1.msra.mxu0 %v150
    %162 = vmatprep.subr.mxu0 0.0
    %163 = vmatpush1.msra.mxu0 %v149
    %164 = vmatprep.subr.mxu0 0.0
    %165 = vmatpush1.msra.mxu0 %v148
    %166 = vmatprep.subr.mxu0 0.0
    %167 = vmatpush1.msra.mxu0 %v147
    %168 = vmatprep.subr.mxu0 0.0
    %169 = vmatpush1.msra.mxu0 %v146
    %170 = vmatprep.subr.mxu0 0.0
    %171 = vmatpush1.msra.mxu0 %v145
    %172 = vmatprep.subr.mxu0 0.0
    %173 = vmatpush1.msra.mxu0 %v144
    %174 = vmatprep.subr.mxu0 0.0
    %175 = vmatpush1.msra.mxu0 %v143
    %176 = vmatprep.subr.mxu0 0.0
    %177 = vmatpush1.msra.mxu0 %v142
    %178 = vmatprep.subr.mxu0 0.0
    %179 = vmatpush1.msra.mxu0 %v141
    %180 = vmatprep.subr.mxu0 0.0
    %181 = vmatpush1.msra.mxu0 %v140
    %182 = vmatprep.subr.mxu0 0.0
    %183 = vmatpush1.msra.mxu0 %v139
    %184 = vmatprep.subr.mxu0 0.0
    %185 = vmatpush1.msra.mxu0 %v138
    %186 = vmatprep.subr.mxu0 0.0
    %187 = vmatpush2.msra.mxu0 0.0
    %188 = vmatprep.subr.mxu0 0.0
    %189 = vmatpush2.msra.mxu0 0.0
    %190 = vmatprep.subr.mxu0 0.0
    %191 = vmatpush2.msra.mxu0 0.0
    %192 = vmatprep.subr.mxu0 0.0
    %193 = vmatpush2.msra.mxu0 0.0
    %194 = vmatprep.subr.mxu0 0.0
    %195 = vmatpush2.msra.mxu0 0.0
    %196 = vmatprep.subr.mxu0 0.0
    %197 = vmatpush2.msra.mxu0 0.0
    %198 = vmatprep.subr.mxu0 0.0
    %199 = vmatpush2.msra.mxu0 0.0
    %200 = vmatprep.subr.mxu0 0.0
    %201 = vmatpush2.msra.mxu0 0.0
    %202 = vmatprep.subr.mxu0 0.0
    %203 = vmatpush2.msra.mxu0 0.0
    %204 = vmatprep.subr.mxu0 0.0
    %205 = vmatpush2.msra.mxu0 0.0
    %206 = vmatprep.subr.mxu0 0.0
    %207 = vmatpush2.msra.mxu0 0.0
    %208 = vmatprep.subr.mxu0 0.0
    %209 = vmatpush2.msra.mxu0 0.0
    %210 = vmatprep.subr.mxu0 0.0
    %211 = vmatpush2.msra.mxu0 0.0
    %212 = vmatprep.subr.mxu0 0.0
    %213 = vmatpush2.msra.mxu0 0.0
    %214 = vmatprep.subr.mxu0 0.0
    %215 = vmatpush2.msra.mxu0 0.0
    %216 = vmatprep.subr.mxu0 0.0
    %217 = vmatpush2.msra.mxu0 0.0
    %218 = vmatprep.mubr.f32.mxu0 0.0
    %219 = vmatmul.mubr.f32.gmra.mxu0 %v137
    %v220 = vpop.f32.mrf.mxu0
    %v221 = vadd.f32 0.0, %v220
    %v222 = vpop.f32.mrf.mxu0
    %223 = vdwg.mxu0
    %224 = vst [vmem:[#allocation2] sm:$0xff] %v221
    // Predicated region
    $region10: #{box_embedding.1} parent=1 // pred_check
      _
    $region11: #{box_embedding.1} parent=1 // pred_check_branch
      %226 = sbr.rel (0) target = $region13
    $region12: #{box_embedding.1} parent=1 // pred_region
      // Predicated region
      $region14: #{box_embedding.1} parent=12 // pred_check
        _
      $region15: #{box_embedding.1} parent=12 // pred_check_branch
        %228 = sbr.rel (0) target = $region17
      $region16: #{box_embedding.1} parent=12 // pred_region
        // Predicated region
        $region18: #{box_embedding.1} parent=16 // pred_check
          _
        $region19: #{box_embedding.1} parent=16 // pred_check_branch
          %230 = sbr.rel target = $region21
        $region20: #{box_embedding.1} parent=16 // pred_region
          // Predicated region
          $region33: #{box_embedding.1} parent=20 // pred_check
            _
          $region34: #{box_embedding.1} parent=20 // pred_check_branch
            %246 = sbr.rel (0) target = $region36
          $region35: #{box_embedding.1} parent=20 // pred_region
            %s248 = ssub.s32 16, 1
            loop: start=0, step=1, limit=1
            $region37: #{box_embedding.1} parent=35 // loop_pre_header
              _
            $region38: #{box_embedding.1} parent=35 // loop_header
              %s250 = sphi 0, %s254
              %p251 = scmp.ge.s32.totalorder %s250, 1
              %s255 = sphi [#allocation2], [#allocation2]
              %s256 = sphi %s2, %s2
            $region39: #{box_embedding.1} parent=35 // loop_header_branch
              %253 = sbr.rel (%p251) target = $region43
            $region40: #{box_embedding.1} parent=35 // loop_body
              %v257 = vld [vmem:[%s255] sm:%s248]
              %258 = vst [vmem:[%s256] sm:%s248] %v257
            $region41: #{box_embedding.1} parent=35 // loop_footer
              %s254 = sadd.s32 1, %s250
            $region42: #{box_embedding.1} parent=35 // loop_footer_branch
              %249 = sbr.rel target = $region38
            $region43: #{box_embedding.1} parent=35 // loop_exit
              _
          $region36: #{box_embedding.1} parent=20 // pred_fallthru
            _
        $region21: #{box_embedding.1} parent=16 // pred_fallthru
          _
        // Predicated region
        $region22: #{box_embedding.1} parent=16 // pred_check
          _
        $region23: #{box_embedding.1} parent=16 // pred_check_branch
          %232 = sbr.rel (0) target = $region25
        $region24: #{box_embedding.1} parent=16 // pred_region
          %s234 = ssub.s32 16, 1
          loop: start=0, step=1, limit=1
          $region26: #{box_embedding.1} parent=24 // loop_pre_header
            _
          $region27: #{box_embedding.1} parent=24 // loop_header
            %s236 = sphi 0, %s240
            %p237 = scmp.ge.s32.totalorder %s236, 1
            %s241 = sphi [#allocation2], [#allocation2]
            %s242 = sphi %s2, %s2
          $region28: #{box_embedding.1} parent=24 // loop_header_branch
            %239 = sbr.rel (%p237) target = $region32
          $region29: #{box_embedding.1} parent=24 // loop_body
            %v243 = vld [vmem:[%s241] sm:%s234]
            %244 = vst [vmem:[%s242] sm:%s234] %v243
          $region30: #{box_embedding.1} parent=24 // loop_footer
            %s240 = sadd.s32 1, %s236
          $region31: #{box_embedding.1} parent=24 // loop_footer_branch
            %235 = sbr.rel target = $region27
          $region32: #{box_embedding.1} parent=24 // loop_exit
            _
        $region25: #{box_embedding.1} parent=16 // pred_fallthru
          _
      $region17: #{box_embedding.1} parent=12 // pred_fallthru
        _
      %259 = vnop
    $region13: #{box_embedding.1} parent=1 // pred_fallthru
      _
    // Predicated region
    $region44: #{box_embedding.1} parent=1 // pred_check
      _
    $region45: #{box_embedding.1} parent=1 // pred_check_branch
      %261 = sbr.rel (0) target = $region47
    $region46: #{box_embedding.1} parent=1 // pred_region
      _
    $region47: #{box_embedding.1} parent=1 // pred_fallthru
      _

</llo_original>
